<compile_context>
chip_gen: v7x
topology: tpu7x:2x2x1
jax: 0.10.0
libtpu: 0.0.40
codegen_flags: <defaults>
</compile_context>

<pallas_src>
import functools
import math

import jax
import jax.numpy as jnp
from jax.experimental import pallas as pl
from jax.experimental.pallas import tpu as pltpu


def _round_up(x: int, m: int) -> int:
    return ((x + m - 1) // m) * m


def _head_transform_kernel(x_ref, w_ref, p_ref, o_ref, *, eps, inv_n, approximate_gelu):
    # x_ref: (TM, K) streamed row tile     w_ref: (K, N) resident weight
    # p_ref: (3, N)  resident [bias; gamma; beta] (f32)
    # o_ref: (TM, N) output tile
    x = x_ref[...]
    w = w_ref[...]

    # Hoisted broadcasts of resident params (one load per grid step).
    bias = p_ref[0:1, :]
    gamma = p_ref[1:2, :]
    beta = p_ref[2:3, :]

    # Dense (MXU). bf16/f32 operands feed the MXU directly; accumulation is f32.
    h = jnp.dot(x, w, preferred_element_type=jnp.float32) + bias

    if approximate_gelu:
        # tanh approximation -> EUP slot (not bit-identical to torch's erf GELU).
        h = jax.nn.gelu(h, approximate=True)
    else:
        # exact erf-based GELU, matches torch.nn.functional.gelu default
        h = 0.5 * h * (1.0 + jax.lax.erf(h * (1.0 / math.sqrt(2.0))))

    # Single-pass LayerNorm over last dim (f32 math): var = E[h^2] - mean^2.
    s1 = jnp.sum(h, axis=-1, keepdims=True)
    s2 = jnp.sum(h * h, axis=-1, keepdims=True)
    mean = s1 * inv_n
    var = s2 * inv_n - mean * mean
    inv = jax.lax.rsqrt(var + eps)
    y = (h - mean) * inv * gamma + beta

    o_ref[...] = y.astype(o_ref.dtype)


def _choose_tm(m: int, tm_max: int) -> int:
    """Balanced row-tile choice: near-equal tiles, sublane-aligned, minimal padding."""
    if m <= tm_max:
        return _round_up(m, 8)
    num_tiles = -(-m // tm_max)
    # Prefer an exact division into sublane-aligned tiles (no padding at all).
    for nt in range(num_tiles, min(num_tiles + 8, m) + 1):
        if m % nt == 0 and (m // nt) % 8 == 0 and (m // nt) <= tm_max:
            return m // nt
    # Otherwise balance: padding is bounded by <= 7 rows total.
    return _round_up(-(-m // num_tiles), 8)


def tabformer_bert_head_transform(
    hidden_states, w, b, gamma, beta, *, eps=1e-12, approximate_gelu=False, tm_max=1024
):
    """hidden_states: [..., field_hidden_size]; w: [hidden, field_hidden] (torch Linear layout)."""
    *lead, k = hidden_states.shape
    n = w.shape[0]
    m = math.prod(lead) if lead else 1

    x2d = hidden_states.reshape(m, k)
    w_kn = w.T  # (K, N)
    # Pack bias / gamma / beta into one resident (3, N) slab -> single DMA.
    params = jnp.stack(
        [b.reshape(n), gamma.reshape(n), beta.reshape(n)], axis=0
    ).astype(jnp.float32)

    in_itemsize = x2d.dtype.itemsize
    out_itemsize = hidden_states.dtype.itemsize
    w_itemsize = w_kn.dtype.itemsize

    # --- VMEM budgeting (conservative for v7x: 64 MiB physical per TC) ---
    # Per-row bytes: double-buffered x + double-buffered out + ~4 full-tile f32 temps (h, y, ...).
    vmem_budget = 48 * 1024 * 1024
    fixed_bytes = k * n * w_itemsize + 3 * n * 4
    per_row_bytes = 2 * k * in_itemsize + 2 * n * out_itemsize + 4 * n * 4
    tm_cap = max(8, ((vmem_budget - fixed_bytes) // per_row_bytes) // 8 * 8)
    tm_max_eff = max(8, min(tm_max, tm_cap))

    # --- Balanced M tiling (avoids the old up-to-2x padding waste) ---
    tm = _choose_tm(m, tm_max_eff)
    m_pad = _round_up(m, tm)
    if m_pad != m:
        x2d = jnp.pad(x2d, ((0, m_pad - m), (0, 0)))
    grid = (m_pad // tm,)

    # Explicit scoped-VMEM limit: covers v5e's 16 MiB default while staying well under
    # v7x's 64 MiB physical per TC.
    working_set = fixed_bytes + tm * per_row_bytes
    vmem_limit = int(min(max(working_set + (4 << 20), 32 << 20), 56 << 20))

    # TODO(synk): for sub-128 hidden sizes (toy configs), pack rows to present a
    # lane-dense (>=128) output to avoid masked partial stores; real BERT hidden
    # sizes (768/1024) are already lane-dense so N is never tiled below 128 here.

    cost = pl.CostEstimate(
        flops=2 * m_pad * k * n + 12 * m_pad * n,
        transcendentals=m_pad * n,
        bytes_accessed=(
            m_pad * k * in_itemsize          # x in
            + k * n * w_itemsize             # weight in (once)
            + 3 * n * 4                      # params in (once)
            + m_pad * n * out_itemsize       # y out
        ),
    )

    out = pl.pallas_call(
        functools.partial(
            _head_transform_kernel,
            eps=eps,
            inv_n=1.0 / float(n),
            approximate_gelu=approximate_gelu,
        ),
        out_shape=jax.ShapeDtypeStruct((m_pad, n), hidden_states.dtype),
        grid_spec=pl.GridSpec(
            grid=grid,
            in_specs=[
                pl.BlockSpec((tm, k), lambda i: (i, 0)),   # streamed row tiles
                pl.BlockSpec((k, n), lambda i: (0, 0)),    # resident weight
                pl.BlockSpec((3, n), lambda i: (0, 0)),    # resident b/gamma/beta
            ],
            out_specs=pl.BlockSpec((tm, n), lambda i: (i, 0)),
        ),
        compiler_params=pltpu.CompilerParams(
            dimension_semantics=("parallel",),  # shard rows across TCs on v7x
            vmem_limit_bytes=vmem_limit,
        ),
        cost_estimate=cost,
    )(x2d, w_kn, params)

    if m_pad != m:
        out = out[:m]
    return out.reshape(*lead, n)


def _reference(hidden_states, w, b, gamma, beta, eps=1e-12):
    h = jnp.einsum("...k,nk->...n", hidden_states, w) + b
    h = 0.5 * h * (1.0 + jax.lax.erf(h / math.sqrt(2.0)))
    mean = jnp.mean(h, axis=-1, keepdims=True)
    var = jnp.mean((h - mean) ** 2, axis=-1, keepdims=True)
    return (h - mean) * jax.lax.rsqrt(var + eps) * gamma + beta


if __name__ == "__main__":
    key = jax.random.PRNGKey(0)
    k_x, k_w, k_b, k_g, k_be, k_x2, k_x3 = jax.random.split(key, 7)

    # --- Test 1: toy module shapes (single grid step) ---
    batch, seq = 2, 8
    field_hidden_size = 32   # config.field_hidden_size
    hidden_size = 64         # config.hidden_size

    x = jax.random.normal(k_x, (batch, seq, field_hidden_size), dtype=jnp.float32)
    # nn.Linear weight shape: (hidden_size, field_hidden_size)
    w = jax.random.normal(k_w, (hidden_size, field_hidden_size), dtype=jnp.float32) * 0.02
    b = jax.random.normal(k_b, (hidden_size,), dtype=jnp.float32) * 0.02
    gamma = jnp.ones((hidden_size,), dtype=jnp.float32) + 0.1 * jax.random.normal(
        k_g, (hidden_size,), dtype=jnp.float32
    )
    beta = 0.1 * jax.random.normal(k_be, (hidden_size,), dtype=jnp.float32)

    out = tabformer_bert_head_transform(x, w, b, gamma, beta)
    out = jax.block_until_ready(out)
    ref = _reference(x, w, b, gamma, beta)
    assert out.shape == (batch, seq, hidden_size)
    assert jnp.allclose(out, ref, atol=1e-5, rtol=1e-5)

    # --- Test 2: ragged M, single balanced tile (M=520 -> TM=520, no padding) ---
    batch2, seq2 = 4, 130
    x2 = jax.random.normal(k_x2, (batch2, seq2, field_hidden_size), dtype=jnp.float32)
    out2 = tabformer_bert_head_transform(x2, w, b, gamma, beta)
    out2 = jax.block_until_ready(out2)
    ref2 = _reference(x2, w, b, gamma, beta)
    assert out2.shape == (batch2, seq2, hidden_size)
    assert jnp.allclose(out2, ref2, atol=1e-5, rtol=1e-5)

    # --- Test 3: multi-step grid via small tm_max (M=520, TM=104, grid=(5,), exact split) ---
    out3 = tabformer_bert_head_transform(x2, w, b, gamma, beta, tm_max=128)
    out3 = jax.block_until_ready(out3)
    assert jnp.allclose(out3, ref2, atol=1e-5, rtol=1e-5)

    # --- Test 4: padding fallback path (M=262, tm_max=128 -> TM=88, pad 2 rows) ---
    x3 = jax.random.normal(k_x3, (2, 131, field_hidden_size), dtype=jnp.float32)
    out4 = tabformer_bert_head_transform(x3, w, b, gamma, beta, tm_max=128)
    out4 = jax.block_until_ready(out4)
    ref4 = _reference(x3, w, b, gamma, beta)
    assert out4.shape == (2, 131, hidden_size)
    assert jnp.allclose(out4, ref4, atol=1e-5, rtol=1e-5)

    print("KERNEL_OK")
</pallas_src>

<mosaic_0001>
module attributes {stable_mosaic.version = 11 : i64} {
  func.func @_head_transform_kernel(%arg0: i32, %arg1: memref<16x32xf32, #tpu.memory_space<vmem>>, %arg2: memref<32x64xf32, #tpu.memory_space<vmem>>, %arg3: memref<3x64xf32, #tpu.memory_space<vmem>>, %arg4: memref<16x64xf32, #tpu.memory_space<vmem>>) attributes {dimension_semantics = [#tpu.dimension_semantics<parallel>], iteration_bounds = array<i64: 1>, scalar_prefetch = 0 : i64, scratch_operands = 0 : i64, tpu.core_type = #tpu.core_type<tc>, window_params = [{transform_indices = @transform_0, window_bounds = array<i64: 16, 32>}, {pipeline_mode = #tpu.pipeline_mode<synchronous>, transform_indices = @transform_1, window_bounds = array<i64: 32, 64>}, {pipeline_mode = #tpu.pipeline_mode<synchronous>, transform_indices = @transform_2, window_bounds = array<i64: 3, 64>}, {transform_indices = @transform_3, window_bounds = array<i64: 16, 64>}]} {
    %c0 = arith.constant 0 : index
    %c0_0 = arith.constant 0 : index
    %0 = vector.load %arg1[%c0, %c0_0] : memref<16x32xf32, #tpu.memory_space<vmem>>, vector<16x32xf32>
    %c0_1 = arith.constant 0 : index
    %c0_2 = arith.constant 0 : index
    %1 = vector.load %arg2[%c0_1, %c0_2] : memref<32x64xf32, #tpu.memory_space<vmem>>, vector<32x64xf32>
    %c0_3 = arith.constant 0 : index
    %c0_4 = arith.constant 0 : index
    %2 = vector.load %arg3[%c0_3, %c0_4] : memref<3x64xf32, #tpu.memory_space<vmem>>, vector<1x64xf32>
    %c1 = arith.constant 1 : index
    %c0_5 = arith.constant 0 : index
    %3 = vector.load %arg3[%c1, %c0_5] : memref<3x64xf32, #tpu.memory_space<vmem>>, vector<1x64xf32>
    %c2 = arith.constant 2 : index
    %c0_6 = arith.constant 0 : index
    %4 = vector.load %arg3[%c2, %c0_6] : memref<3x64xf32, #tpu.memory_space<vmem>>, vector<1x64xf32>
    %cst = arith.constant dense<0.000000e+00> : vector<16x64xf32>
    %5 = tpu.matmul %0, %1, %cst {dimension_numbers = #tpu.dot_dimension_numbers<[1], [0], [0], [1], [0, 0, 1, 1], [], []>} : vector<16x32xf32>, vector<32x64xf32>, vector<16x64xf32> -> vector<16x64xf32>
    %6 = vector.broadcast %2 : vector<1x64xf32> to vector<16x64xf32>
    %7 = arith.addf %5, %6 : vector<16x64xf32>
    %cst_7 = arith.constant 5.000000e-01 : f32
    %8 = vector.broadcast %cst_7 : f32 to vector<16x64xf32>
    %9 = arith.mulf %8, %7 : vector<16x64xf32>
    %cst_8 = arith.constant 0.707106769 : f32
    %10 = vector.broadcast %cst_8 : f32 to vector<16x64xf32>
    %11 = arith.mulf %7, %10 : vector<16x64xf32>
    %12 = math.erf %11 : vector<16x64xf32>
    %cst_9 = arith.constant 1.000000e+00 : f32
    %13 = vector.broadcast %cst_9 : f32 to vector<16x64xf32>
    %14 = arith.addf %13, %12 : vector<16x64xf32>
    %15 = arith.mulf %9, %14 : vector<16x64xf32>
    %cst_10 = arith.constant dense<0.000000e+00> : vector<16xf32>
    %16 = vector.multi_reduction <add>, %15, %cst_10 [1] : vector<16x64xf32> to vector<16xf32>
    %17 = vector.shape_cast %16 : vector<16xf32> to vector<16x1xf32>
    %18 = arith.mulf %15, %15 : vector<16x64xf32>
    %cst_11 = arith.constant dense<0.000000e+00> : vector<16xf32>
    %19 = vector.multi_reduction <add>, %18, %cst_11 [1] : vector<16x64xf32> to vector<16xf32>
    %20 = vector.shape_cast %19 : vector<16xf32> to vector<16x1xf32>
    %cst_12 = arith.constant 1.562500e-02 : f32
    %21 = vector.broadcast %cst_12 : f32 to vector<16x1xf32>
    %22 = arith.mulf %17, %21 : vector<16x1xf32>
    %cst_13 = arith.constant 1.562500e-02 : f32
    %23 = vector.broadcast %cst_13 : f32 to vector<16x1xf32>
    %24 = arith.mulf %20, %23 : vector<16x1xf32>
    %25 = arith.mulf %22, %22 : vector<16x1xf32>
    %26 = arith.subf %24, %25 : vector<16x1xf32>
    %cst_14 = arith.constant 9.99999996E-13 : f32
    %27 = vector.broadcast %cst_14 : f32 to vector<16x1xf32>
    %28 = arith.addf %26, %27 : vector<16x1xf32>
    %29 = math.rsqrt %28 : vector<16x1xf32>
    %30 = vector.broadcast %22 : vector<16x1xf32> to vector<16x64xf32>
    %31 = arith.subf %15, %30 : vector<16x64xf32>
    %32 = vector.broadcast %29 : vector<16x1xf32> to vector<16x64xf32>
    %33 = arith.mulf %31, %32 : vector<16x64xf32>
    %34 = vector.broadcast %3 : vector<1x64xf32> to vector<16x64xf32>
    %35 = arith.mulf %33, %34 : vector<16x64xf32>
    %36 = vector.broadcast %4 : vector<1x64xf32> to vector<16x64xf32>
    %37 = arith.addf %35, %36 : vector<16x64xf32>
    %c0_15 = arith.constant 0 : index
    %c0_16 = arith.constant 0 : index
    %38 = vector.load %arg4[%c0_15, %c0_16] : memref<16x64xf32, #tpu.memory_space<vmem>>, vector<16x64xf32>
    tpu.vector_store %arg4[%c0_15, %c0_16], %37 {strides = array<i32>} : memref<16x64xf32, #tpu.memory_space<vmem>>, vector<16x64xf32>,
    return
  }
  func.func @transform_0(%arg0: i32) -> (i32, i32) {
    %c0_i32 = arith.constant 0 : i32
    %c0_i32_0 = arith.constant 0 : i32
    return %arg0, %c0_i32 : i32, i32
  }
  func.func @transform_1(%arg0: i32) -> (i32, i32) {
    %c0_i32 = arith.constant 0 : i32
    %c0_i32_0 = arith.constant 0 : i32
    %c0_i32_1 = arith.constant 0 : i32
    return %c0_i32, %c0_i32_0 : i32, i32
  }
  func.func @transform_2(%arg0: i32) -> (i32, i32) {
    %c0_i32 = arith.constant 0 : i32
    %c0_i32_0 = arith.constant 0 : i32
    %c0_i32_1 = arith.constant 0 : i32
    return %c0_i32, %c0_i32_0 : i32, i32
  }
  func.func @transform_3(%arg0: i32) -> (i32, i32) {
    %c0_i32 = arith.constant 0 : i32
    %c0_i32_0 = arith.constant 0 : i32
    return %arg0, %c0_i32 : i32, i32
  }
}

</mosaic_0001>

<llo_original>
// kernel: tpu_custom_call.1
$region0: #{tpu_custom_call.1}
  #allocation0 [shape = 'u32[]', space=smem, size = 0x4, offset = 0x4, fixed_abs, tag = 'smem constant byte address 0x4 - core index']
  #allocation1 [shape = 'u32[144,128]{1,0:T(1,128)}', space=vmem, size = 0x12000, scoped, tag = 'internal scratch']
  %s0 = inlined_call_operand.hbm [shape: f32[16,32], index: 0, kind: input, shape index: {}]
  %s1 = inlined_call_operand.hbm [shape: f32[32,64], index: 1, kind: input, shape index: {}]
  %s2 = inlined_call_operand.vmem [shape: f32[3,64], index: 2, kind: input, shape index: {}]
  %s3 = inlined_call_operand.hbm [shape: f32[16,64], index: 3, kind: output, shape index: {}]
  %s4 = sld [smem:[#allocation0]]
  $region30: #{tpu_custom_call.1} parent=0
    _
  %s6 = ssub.s32 1, %s4
  %s7 = scalar_select 0, %s6, %s4
  $region1: #{tpu_custom_call.1} parent=0
    #allocation2 [shape = 'u8[8192]{0}', space=vmem, size = 0x2000, scoped, tag = 'input window, operand 0, single buffered']
    #allocation3 [shape = 's32[1]{0}', space=sflag, size = 0x4, scoped, tag = 'scoped memory for tpu_custom_call.1']
    #allocation4 [shape = 's32[1]{0}', space=sflag, size = 0x4, scoped, tag = 'scoped memory for tpu_custom_call.1']
    #allocation5 [shape = 'u8[16384]{0}', space=vmem, size = 0x4000, scoped, tag = 'input window, operand 1, single buffered']
    #allocation6 [shape = 's32[1]{0}', space=sflag, size = 0x4, scoped, tag = 'scoped memory for tpu_custom_call.1']
    #allocation7 [shape = 'u8[8192]{0}', space=vmem, size = 0x2000, scoped, tag = 'output window, operand 0, single buffered']
    %8 = vsyncpa [#allocation3], 0
    %9 = vsyncpa [#allocation6], 0
    %10 = vsyncpa [#allocation4], 0
    // Predicated region
    $region2: #{tpu_custom_call.1} parent=1 // pred_check
      _
    $region3: #{tpu_custom_call.1} parent=1 // pred_check_branch
      %12 = sbr.rel (0) target = $region5
    $region4: #{tpu_custom_call.1} parent=1 // pred_region
      %s14 = ssub.s32 256, 256
      %15 = vsyncadd [#allocation3], %s14
      %s16 = sshll.u32 [#allocation2], 4
      %s17 = int_to_ptr.vmem [resolvable:$true] %s16
      %22 = dma.hbm_to_vmem [thread:$0]  %s0, 256, %s17, [#allocation3], 128, 128, 8
    $region5: #{tpu_custom_call.1} parent=1 // pred_fallthru
      _
    // Predicated region
    $region6: #{tpu_custom_call.1} parent=1 // pred_check
      _
    $region7: #{tpu_custom_call.1} parent=1 // pred_check_branch
      %24 = sbr.rel (0) target = $region9
    $region8: #{tpu_custom_call.1} parent=1 // pred_region
      %s26 = ssub.s32 512, 512
      %27 = vsyncadd [#allocation6], %s26
      %s28 = sshll.u32 [#allocation5], 4
      %s29 = int_to_ptr.vmem [resolvable:$true] %s28
      %34 = dma.hbm_to_vmem [thread:$0]  %s1, 512, %s29, [#allocation6], 128, 128, 8
    $region9: #{tpu_custom_call.1} parent=1 // pred_fallthru
      _
    // Predicated region
    $region10: #{tpu_custom_call.1} parent=1 // pred_check
      _
    $region11: #{tpu_custom_call.1} parent=1 // pred_check_branch
      %36 = sbr.rel (0) target = $region13
    $region12: #{tpu_custom_call.1} parent=1 // pred_region
      _
    $region13: #{tpu_custom_call.1} parent=1 // pred_fallthru
      _
    // Predicated region
    $region14: #{tpu_custom_call.1} parent=1 // pred_check
      _
    $region15: #{tpu_custom_call.1} parent=1 // pred_check_branch
      %38 = sbr.rel (0) target = $region17
    $region16: #{tpu_custom_call.1} parent=1 // pred_region
      %39 = dma.done [#allocation3], 256
    $region17: #{tpu_custom_call.1} parent=1 // pred_fallthru
      _
    // Predicated region
    $region18: #{tpu_custom_call.1} parent=1 // pred_check
      _
    $region19: #{tpu_custom_call.1} parent=1 // pred_check_branch
      %41 = sbr.rel (0) target = $region21
    $region20: #{tpu_custom_call.1} parent=1 // pred_region
      %42 = dma.done [#allocation6], 512
    $region21: #{tpu_custom_call.1} parent=1 // pred_fallthru
      _
    %v43 = vld [vmem:[#allocation2] sm:$0xff]
    %v44 = vld [vmem:[#allocation2 + $0x8] sm:$0xff]
    %v45 = vld [vmem:[#allocation5] sm:$0xff]
    %v46 = vld [vmem:[#allocation5 + $0x8] sm:$0xff]
    %v47 = vld [vmem:[#allocation5 + $0x10] sm:$0xff]
    %v48 = vld [vmem:[#allocation5 + $0x18] sm:$0xff]
    %v49 = vld [vmem:[%s2] sm:$0x1]
    %v50 = vld [vmem:[%s2 + $0x1] sm:$0x1]
    %v51 = vld [vmem:[%s2 + $0x2] sm:$0x1]
    %v52 = vlaneseq
    %v53 = vshrl.u32 %v52, 7
    %v54 = vsub.s32 0, %v53
    %v55 = vrot.slane %v49, %v54
    %vm56 = vcmask 261120
    %v58 = vsel %vm56, %v43, 0
    %v61 = vsel %vm56, %v44, 0
    %63 = vmatprep.subr.mxu0 0.0
    %64 = vmatpush1.msra.mxu0 %v45
    %65 = vmatprep.subr.mxu0 0.0
    %66 = vmatpush1.msra.mxu0 %v46
    %67 = vmatprep.subr.mxu0 0.0
    %68 = vmatpush1.msra.mxu0 %v47
    %69 = vmatprep.subr.mxu0 0.0
    %70 = vmatpush1.msra.mxu0 %v48
    %71 = vmatprep.subr.mxu0 0.0
    %72 = vmatpush1.msra.mxu0 0.0
    %73 = vmatprep.subr.mxu0 0.0
    %74 = vmatpush1.msra.mxu0 0.0
    %75 = vmatprep.subr.mxu0 0.0
    %76 = vmatpush1.msra.mxu0 0.0
    %77 = vmatprep.subr.mxu0 0.0
    %78 = vmatpush1.msra.mxu0 0.0
    %79 = vmatprep.subr.mxu0 0.0
    %80 = vmatpush1.msra.mxu0 0.0
    %81 = vmatprep.subr.mxu0 0.0
    %82 = vmatpush1.msra.mxu0 0.0
    %83 = vmatprep.subr.mxu0 0.0
    %84 = vmatpush1.msra.mxu0 0.0
    %85 = vmatprep.subr.mxu0 0.0
    %86 = vmatpush1.msra.mxu0 0.0
    %87 = vmatprep.subr.mxu0 0.0
    %88 = vmatpush1.msra.mxu0 0.0
    %89 = vmatprep.subr.mxu0 0.0
    %90 = vmatpush1.msra.mxu0 0.0
    %91 = vmatprep.subr.mxu0 0.0
    %92 = vmatpush1.msra.mxu0 0.0
    %93 = vmatprep.subr.mxu0 0.0
    %94 = vmatpush1.msra.mxu0 0.0
    %95 = vmatprep.subr.mxu0 0.0
    %96 = vmatpush1.msra.mxu0 0.0
    %97 = vmatprep.subr.mxu0 0.0
    %98 = vmatpush1.msra.mxu0 0.0
    %99 = vmatprep.subr.mxu0 0.0
    %100 = vmatpush1.msra.mxu0 0.0
    %101 = vmatprep.subr.mxu0 0.0
    %102 = vmatpush1.msra.mxu0 0.0
    %103 = vmatprep.subr.mxu0 0.0
    %104 = vmatpush1.msra.mxu0 0.0
    %105 = vmatprep.subr.mxu0 0.0
    %106 = vmatpush1.msra.mxu0 0.0
    %107 = vmatprep.subr.mxu0 0.0
    %108 = vmatpush1.msra.mxu0 0.0
    %109 = vmatprep.subr.mxu0 0.0
    %110 = vmatpush1.msra.mxu0 0.0
    %111 = vmatprep.subr.mxu0 0.0
    %112 = vmatpush1.msra.mxu0 0.0
    %113 = vmatprep.subr.mxu0 0.0
    %114 = vmatpush1.msra.mxu0 0.0
    %115 = vmatprep.subr.mxu0 0.0
    %116 = vmatpush1.msra.mxu0 0.0
    %117 = vmatprep.subr.mxu0 0.0
    %118 = vmatpush1.msra.mxu0 0.0
    %119 = vmatprep.subr.mxu0 0.0
    %120 = vmatpush1.msra.mxu0 0.0
    %121 = vmatprep.subr.mxu0 0.0
    %122 = vmatpush1.msra.mxu0 0.0
    %123 = vmatprep.subr.mxu0 0.0
    %124 = vmatpush1.msra.mxu0 0.0
    %125 = vmatprep.subr.mxu0 0.0
    %126 = vmatpush1.msra.mxu0 0.0
    %127 = vmatprep.mubr.f32.mxu0 0.0
    %128 = vmatmul.mubr.f32.gmra.mrb[0].mxu0 %v58
    %v129 = vpop.f32.mrb[0].mxu0
    %v130 = vadd.f32 %v55, %v129
    %v131 = vpop.f32.mrb[0].mxu0
    %132 = vmatprep.mubr.f32.mxu0 0.0
    %133 = vmatmul.mubr.f32.gmra.mrb[0].mxu0 %v61
    %v134 = vpop.f32.mrb[0].mxu0
    %v135 = vadd.f32 %v55, %v134
    %v136 = vpop.f32.mrb[0].mxu0
    %137 = vdwg.mxu0
    %v138 = vmul.f32 %v130, 0.5
    %v139 = vmul.f32 %v135, 0.5
    %v140 = vmul.f32 %v130, 0.70710677
    %v141 = vmul.f32 %v135, 0.70710677
    %v142 = verf.f32.pop %v140
    %v143 = verf.f32.pop %v141
    %v144 = vadd.f32 %v142, 1.0
    %v145 = vadd.f32 %v143, 1.0
    %v146 = vmul.f32 %v138, %v144
    %v147 = vmul.f32 %v139, %v145
    %vm148 = vcmask 523264
    %v149 = vsel %vm148, %v146, 0.0
    %150 = vadd.xlane.f32.xlu0 %v149
    %v151 = vpop.xlane.xlu0 %150
    %v152 = vsel %vm148, %v147, 0.0
    %153 = vadd.xlane.f32.xlu0 %v152
    %v154 = vpop.xlane.xlu0 %153
    %v155 = vmul.f32 %v146, %v146
    %v156 = vmul.f32 %v147, %v147
    %v157 = vsel %vm148, %v155, 0.0
    %158 = vadd.xlane.f32.xlu0 %v157
    %v159 = vpop.xlane.xlu0 %158
    %v160 = vsel %vm148, %v156, 0.0
    %161 = vadd.xlane.f32.xlu0 %v160
    %v162 = vpop.xlane.xlu0 %161
    %v163 = vmul.f32 %v151, 0.015625
    %v164 = vmul.f32 %v154, 0.015625
    %v165 = vmul.f32 %v159, 0.015625
    %v166 = vmul.f32 %v162, 0.015625
    %v167 = vmul.f32 %v163, %v163
    %v168 = vmul.f32 %v164, %v164
    %v169 = vsub.f32 %v165, %v167
    %v170 = vsub.f32 %v166, %v168
    %v171 = vadd.f32 %v169, 1e-12
    %v172 = vadd.f32 %v170, 1e-12
    %v173 = vrsqrt.pop %v171
    %v174 = vrsqrt.pop %v172
    %v175 = vsub.f32 %v146, %v163
    %v176 = vsub.f32 %v147, %v164
    %v177 = vmul.f32 %v175, %v173
    %v178 = vmul.f32 %v176, %v174
    %v179 = vlaneseq
    %v180 = vshrl.u32 %v179, 7
    %v181 = vsub.s32 0, %v180
    %v182 = vrot.slane %v50, %v181
    %v183 = vmul.f32 %v177, %v182
    %v184 = vmul.f32 %v178, %v182
    %v185 = vlaneseq
    %v186 = vshrl.u32 %v185, 7
    %v187 = vsub.s32 0, %v186
    %v188 = vrot.slane %v51, %v187
    %v189 = vadd.f32 %v183, %v188
    %v190 = vadd.f32 %v184, %v188
    %191 = vst.msk [vmem:[#allocation7] sm:$0xff] %vm148, %v189
    %192 = vst.msk [vmem:[#allocation7 + $0x8] sm:$0xff] %vm148, %v190
    // Predicated region
    $region22: #{tpu_custom_call.1} parent=1 // pred_check
      _
    $region23: #{tpu_custom_call.1} parent=1 // pred_check_branch
      %194 = sbr.rel (0) target = $region25
    $region24: #{tpu_custom_call.1} parent=1 // pred_region
      %s196 = ssub.s32 256, 256
      %197 = vsyncadd [#allocation4], %s196
      %s198 = sshll.u32 [#allocation7], 4
      %s199 = int_to_ptr.vmem [resolvable:$true] %s198
      %204 = dma.vmem_to_hbm [thread:$0]  %s199, 256, %s3, [#allocation4], 128, 128, 8
    $region25: #{tpu_custom_call.1} parent=1 // pred_fallthru
      _
    // Predicated region
    $region26: #{tpu_custom_call.1} parent=1 // pred_check
      _
    $region27: #{tpu_custom_call.1} parent=1 // pred_check_branch
      %206 = sbr.rel (0) target = $region29
    $region28: #{tpu_custom_call.1} parent=1 // pred_region
      %207 = dma.done [#allocation4], 256
    $region29: #{tpu_custom_call.1} parent=1 // pred_fallthru
      _
    %208 = vsyncpa [#allocation3], 1
    %209 = vsyncpa [#allocation6], 1
    %210 = vsyncpa [#allocation4], 1

</llo_original>
